<compile_context>
chip_gen: v7x
topology: tpu7x:2x2x1
jax: 0.10.0
libtpu: 0.0.40
codegen_flags: <defaults>
</compile_context>

<pallas_src>
import jax
import jax.numpy as jnp
import numpy as np
from jax.experimental import pallas as pl
from jax.experimental.pallas import tpu as pltpu


def _round_up(x, m):
    return ((x + m - 1) // m) * m


def _patch_embed_gemm_kernel(p_ref, w_ref, b_ref, o_ref):
    """One (tm, K_pad) x (K_pad, N_pad) MXU matmul per grid step.

    K_pad is small for a patch embed, so it stays fully resident in the block
    (no reduction grid axis / accumulator scratch).  Accumulation is f32 on the
    MXU; the bias add happens in f32 before the epilogue cast to o_ref.dtype.
    """
    acc = jnp.dot(p_ref[...], w_ref[...], preferred_element_type=jnp.float32)
    o_ref[...] = (acc + b_ref[...]).astype(o_ref.dtype)


def _im2col_nhwc(x_nhwc, kh, kw, sh, sw, ph, pw):
    """(B,H,W,C) -> (B*Ho*Wo, kh*kw*C) patches.  K ordering is (dy, dx, c).

    Runs entirely in the input dtype (bf16), so the ~3x-sized patches stream is
    never materialized in f32.
    """
    B, H, W, C = x_nhwc.shape
    Ho = (H + 2 * ph - kh) // sh + 1
    Wo = (W + 2 * pw - kw) // sw + 1
    xp = jnp.pad(x_nhwc, ((0, 0), (ph, ph), (pw, pw), (0, 0)))
    cols = []
    for dy in range(kh):
        for dx in range(kw):
            sl = xp[:, dy:dy + sh * (Ho - 1) + 1:sh,
                    dx:dx + sw * (Wo - 1) + 1:sw, :]       # (B, Ho, Wo, C)
            cols.append(sl)
    patches = jnp.concatenate(cols, axis=-1)               # (B, Ho, Wo, kh*kw*C)
    return patches.reshape(B * Ho * Wo, kh * kw * C), Ho, Wo


def overlap_patch_embed_forward(x_nchw, conv_w, conv_b, *, stride,
                                compute_dtype=jnp.bfloat16,
                                out_dtype=jnp.bfloat16,
                                output_layout="NCHW",
                                allow_input_fusion=False):
    """OverlapPatchEmbed.forward.

    x: (B,C,H,W), conv_w: (O,C,kh,kw), conv_b: (O,).  padding = (kh//2, kw//2)
    as in the module.  Returns (B, O, Ho, Wo) for output_layout="NCHW"
    (module-matching) or (B, Ho, Wo, O) for "NHWC" (skips the XLA transpose).
    """
    B, C, H, W = x_nchw.shape
    O, Cw, kh, kw = conv_w.shape
    assert Cw == C, "conv weight in_channels mismatch"
    sh, sw = (stride, stride) if isinstance(stride, int) else stride
    ph, pw = kh // 2, kw // 2

    # ---- im2col layout prep (XLA side, in bf16; see TODO at top of file) ----
    x_nhwc = jnp.transpose(x_nchw, (0, 2, 3, 1)).astype(compute_dtype)
    patches, Ho, Wo = _im2col_nhwc(x_nhwc, kh, kw, sh, sw, ph, pw)
    M, K = patches.shape

    # Weight as (K, O), K ordered (dy, dx, c) to match the patches.
    w_mat = jnp.transpose(conv_w, (2, 3, 1, 0)).reshape(K, O).astype(compute_dtype)
    bias = conv_b.reshape(1, O).astype(jnp.float32)        # bias added in f32

    # ---- padding / tiling ----------------------------------------------------
    K_pad = _round_up(K, 128)            # lane-dense patch loads, clean MXU K
    N_pad = _round_up(O, 128)            # lane-dense unmasked stores
    M16 = _round_up(max(M, 16), 16)      # bf16 sublane-pair alignment
    tm = min(512, M16)
    if tm == M16 and M16 >= 32:
        # v7x: guarantee >= 2 M tiles so both TensorCores get work on the
        # parallel grid axis (no-op cost on single-TC v5e/v6e).
        tm = _round_up(M16 // 2, 16)
    M_pad = _round_up(M16, tm)

    patches = jnp.pad(patches, ((0, M_pad - M), (0, K_pad - K)))
    w_mat = jnp.pad(w_mat, ((0, K_pad - K), (0, N_pad - O)))
    bias = jnp.pad(bias, ((0, 0), (0, N_pad - O)))

    grid = (M_pad // tm,)

    cp_kwargs = dict(
        dimension_semantics=("parallel",),
        # Per-step (double-buffered): 2*tm*(K_pad + N_pad)*2B + resident
        # weight/bias (K_pad*N_pad*2B) -- a few MiB at most; keep well under
        # the 32 MiB scoped default (v7x physical VMEM is only 64 MiB).
        vmem_limit_bytes=32 * 1024 * 1024,
    )
    if allow_input_fusion:
        # Best effort: let XLA fuse the im2col pad/slice/concat into the Pallas
        # input fetch so `patches` never round-trips through HBM.
        cp_kwargs["allow_input_fusion"] = [0]

    out_flat = pl.pallas_call(
        _patch_embed_gemm_kernel,
        out_shape=jax.ShapeDtypeStruct((M_pad, N_pad), out_dtype),
        grid=grid,
        in_specs=[
            pl.BlockSpec((tm, K_pad), lambda i: (i, 0)),      # patch rows (streamed)
            pl.BlockSpec((K_pad, N_pad), lambda i: (0, 0)),   # weight: VMEM-resident
            pl.BlockSpec((1, N_pad), lambda i: (0, 0)),       # bias:   VMEM-resident
        ],
        out_specs=pl.BlockSpec((tm, N_pad), lambda i: (i, 0)),
        compiler_params=pltpu.CompilerParams(**cp_kwargs),
    )(patches, w_mat, bias)

    out = out_flat[:M, :O].reshape(B, Ho, Wo, O)              # NHWC
    if output_layout == "NHWC":
        return out
    return jnp.transpose(out, (0, 3, 1, 2))                   # NCHW (B, O, Ho, Wo)


def overlap_patch_embed_reference(x_nchw, conv_w, conv_b, *, stride,
                                  compute_dtype=jnp.bfloat16):
    """Independent pure-JAX mirror of the PyTorch forward (strided padded conv +
    bias) using the same bf16-rounded operands and f32 accumulation."""
    B, C, H, W = x_nchw.shape
    O, _, kh, kw = conv_w.shape
    sh, sw = (stride, stride) if isinstance(stride, int) else stride
    ph, pw = kh // 2, kw // 2
    Ho = (H + 2 * ph - kh) // sh + 1
    Wo = (W + 2 * pw - kw) // sw + 1

    xb = x_nchw.astype(compute_dtype).astype(jnp.float32)
    wb = conv_w.astype(compute_dtype).astype(jnp.float32)
    xp = jnp.pad(xb, ((0, 0), (0, 0), (ph, ph), (pw, pw)))

    out = jnp.zeros((B, O, Ho, Wo), jnp.float32)
    for dy in range(kh):
        for dx in range(kw):
            xs = xp[:, :, dy:dy + sh * (Ho - 1) + 1:sh,
                    dx:dx + sw * (Wo - 1) + 1:sw]             # (B, C, Ho, Wo)
            out = out + jnp.einsum('bchw,oc->bohw', xs, wb[:, :, dy, dx])
    return out + conv_b[None, :, None, None].astype(jnp.float32)


if __name__ == "__main__":
    key = jax.random.PRNGKey(0)
    # Small shapes consistent with the module (patch_size is a tuple, as the
    # module's __init__ indexes it): B=2, in_chans=3, 32x32 input, 7x7/stride-4
    # overlapping patches, embed_dim=64.
    B, C, H, W = 2, 3, 32, 32
    patch_size = (7, 7)
    stride = 4
    embed_dim = 64

    k1, k2, k3 = jax.random.split(key, 3)
    x = jax.random.normal(k1, (B, C, H, W), jnp.float32)
    fan_in = C * patch_size[0] * patch_size[1]
    conv_w = jax.random.normal(
        k2, (embed_dim, C, patch_size[0], patch_size[1]), jnp.float32) / np.sqrt(fan_in)
    conv_b = 0.1 * jax.random.normal(k3, (embed_dim,), jnp.float32)

    out = overlap_patch_embed_forward(x, conv_w, conv_b, stride=stride)
    out = jax.block_until_ready(out)

    ref = overlap_patch_embed_reference(x, conv_w, conv_b, stride=stride)

    Ho = (H + 2 * (patch_size[0] // 2) - patch_size[0]) // stride + 1
    Wo = (W + 2 * (patch_size[1] // 2) - patch_size[1]) // stride + 1
    assert out.shape == (B, embed_dim, Ho, Wo), out.shape
    assert out.dtype == jnp.bfloat16, out.dtype

    # bf16 output + bf16 MXU operands (f32 accumulation): compare in f32 with a
    # bf16-scale tolerance.
    out_f32 = np.asarray(jnp.asarray(out, jnp.float32))
    np.testing.assert_allclose(out_f32, np.asarray(ref), rtol=2e-2, atol=2e-2)

    print("KERNEL_OK")
</pallas_src>

<mosaic_0001>
module attributes {stable_mosaic.version = 11 : i64} {
  func.func @_patch_embed_gemm_kernel(%arg0: i32, %arg1: memref<64x256xbf16, #tpu.memory_space<vmem>>, %arg2: memref<256x128xbf16, #tpu.memory_space<vmem>>, %arg3: memref<1x128xf32, #tpu.memory_space<vmem>>, %arg4: memref<64x128xbf16, #tpu.memory_space<vmem>>) attributes {dimension_semantics = [#tpu.dimension_semantics<parallel>], iteration_bounds = array<i64: 2>, scalar_prefetch = 0 : i64, scratch_operands = 0 : i64, tpu.core_type = #tpu.core_type<tc>, window_params = [{transform_indices = @transform_0, window_bounds = array<i64: 64, 256>}, {pipeline_mode = #tpu.pipeline_mode<synchronous>, transform_indices = @transform_1, window_bounds = array<i64: 256, 128>}, {pipeline_mode = #tpu.pipeline_mode<synchronous>, transform_indices = @transform_2, window_bounds = array<i64: 1, 128>}, {transform_indices = @transform_3, window_bounds = array<i64: 64, 128>}]} {
    %c0 = arith.constant 0 : index
    %c0_0 = arith.constant 0 : index
    %0 = vector.load %arg1[%c0, %c0_0] : memref<64x256xbf16, #tpu.memory_space<vmem>>, vector<64x256xbf16>
    %c0_1 = arith.constant 0 : index
    %c0_2 = arith.constant 0 : index
    %1 = vector.load %arg2[%c0_1, %c0_2] : memref<256x128xbf16, #tpu.memory_space<vmem>>, vector<256x128xbf16>
    %cst = arith.constant dense<0.000000e+00> : vector<64x128xf32>
    %2 = tpu.matmul %0, %1, %cst {dimension_numbers = #tpu.dot_dimension_numbers<[1], [0], [0], [1], [0, 0, 1, 1], [], []>} : vector<64x256xbf16>, vector<256x128xbf16>, vector<64x128xf32> -> vector<64x128xf32>
    %c0_3 = arith.constant 0 : index
    %c0_4 = arith.constant 0 : index
    %3 = vector.load %arg3[%c0_3, %c0_4] : memref<1x128xf32, #tpu.memory_space<vmem>>, vector<1x128xf32>
    %4 = vector.broadcast %3 : vector<1x128xf32> to vector<64x128xf32>
    %5 = arith.addf %2, %4 : vector<64x128xf32>
    %6 = arith.truncf %5 : vector<64x128xf32> to vector<64x128xbf16>
    %c0_5 = arith.constant 0 : index
    %c0_6 = arith.constant 0 : index
    %7 = vector.load %arg4[%c0_5, %c0_6] : memref<64x128xbf16, #tpu.memory_space<vmem>>, vector<64x128xbf16>
    tpu.vector_store %arg4[%c0_5, %c0_6], %6 {strides = array<i32>} : memref<64x128xbf16, #tpu.memory_space<vmem>>, vector<64x128xbf16>,
    return
  }
  func.func @transform_0(%arg0: i32) -> (i32, i32) {
    %c0_i32 = arith.constant 0 : i32
    %c0_i32_0 = arith.constant 0 : i32
    return %arg0, %c0_i32 : i32, i32
  }
  func.func @transform_1(%arg0: i32) -> (i32, i32) {
    %c0_i32 = arith.constant 0 : i32
    %c0_i32_0 = arith.constant 0 : i32
    %c0_i32_1 = arith.constant 0 : i32
    return %c0_i32, %c0_i32_0 : i32, i32
  }
  func.func @transform_2(%arg0: i32) -> (i32, i32) {
    %c0_i32 = arith.constant 0 : i32
    %c0_i32_0 = arith.constant 0 : i32
    %c0_i32_1 = arith.constant 0 : i32
    return %c0_i32, %c0_i32_0 : i32, i32
  }
  func.func @transform_3(%arg0: i32) -> (i32, i32) {
    %c0_i32 = arith.constant 0 : i32
    %c0_i32_0 = arith.constant 0 : i32
    return %arg0, %c0_i32 : i32, i32
  }
}

</mosaic_0001>

<llo_original>
// kernel: tpu_custom_call.1
$region0: #{tpu_custom_call.1}
  #allocation0 [shape = 'u32[]', space=smem, size = 0x4, offset = 0x4, fixed_abs, tag = 'smem constant byte address 0x4 - core index']
  #allocation1 [shape = 'u32[144,128]{1,0:T(1,128)}', space=vmem, size = 0x12000, scoped, tag = 'internal scratch']
  %s0 = inlined_call_operand.hbm [shape: bf16[128,256], index: 0, kind: input, shape index: {}]
  %s1 = inlined_call_operand.hbm [shape: bf16[256,128], index: 1, kind: input, shape index: {}]
  %s2 = inlined_call_operand.vmem [shape: f32[1,128], index: 2, kind: input, shape index: {}]
  %s3 = inlined_call_operand.hbm [shape: bf16[128,128], index: 3, kind: output, shape index: {}]
  %s4 = sld [smem:[#allocation0]]
  $region53: #{tpu_custom_call.1} parent=0
    _
  %s6 = ssub.s32 1, %s4
  %s7 = scalar_select 0, %s6, %s4
  $region1: #{tpu_custom_call.1} parent=0
    #allocation2 [shape = 'u8[65536]{0}', space=vmem, size = 0x10000, scoped, tag = 'input window, operand 0']
    #allocation3 [shape = 's32[2]{0}', space=sflag, size = 0x8, scoped, tag = 'scoped memory for tpu_custom_call.1']
    #allocation4 [shape = 's32[2]{0}', space=sflag, size = 0x8, scoped, tag = 'scoped memory for tpu_custom_call.1']
    #allocation5 [shape = 'u8[65536]{0}', space=vmem, size = 0x10000, scoped, tag = 'input window, operand 1, single buffered']
    #allocation6 [shape = 's32[1]{0}', space=sflag, size = 0x4, scoped, tag = 'scoped memory for tpu_custom_call.1']
    #allocation7 [shape = 'u8[32768]{0}', space=vmem, size = 0x8000, scoped, tag = 'output window, operand 0']
    %8 = vsyncpa [#allocation3], 0
    %s9 = scalar_lea.sflag [#allocation3], 1
    %10 = vsyncpa %s9, 0
    %11 = vsyncpa [#allocation6], 0
    %12 = vsyncpa [#allocation4], 0
    %s13 = scalar_lea.sflag [#allocation4], 1
    %14 = vsyncpa %s13, 0
    loop: start=0, step=1, limit=4
    $region2: #{tpu_custom_call.1} parent=1 // loop_pre_header
      _
    $region3: #{tpu_custom_call.1} parent=1 // loop_header
      %s16 = sphi 0, %s20
      %p17 = scmp.ge.s32.totalorder %s16, 4
      %s26 = sphi 0, %s28
      %s29 = sphi 0, %s26
      %s30 = sphi 0, %s29
      %s46 = sphi 0, %s30
      %s50 = sphi 0, %s50
      %s52 = sphi 0, %s50
      %s53 = sphi 0, %s52
      %s67 = sphi 0, %s53
      %s71 = sphi 0, %s71
      %s73 = sphi 0, %s71
      %s74 = sphi 0, %s73
      %s88 = sphi 0, %s74
      %s94 = sphi 0, %s96
      %s97 = sphi 0, %s94
      %s98 = sphi 0, %s97
      %s114 = sphi 0, %s98
    $region4: #{tpu_custom_call.1} parent=1 // loop_header_branch
      %19 = sbr.rel (%p17) target = $region8
    $region5: #{tpu_custom_call.1} parent=1 // loop_body
      %s21 = ssub.s32 %s16, 1
      %s22 = ssub.s32 %s16, 2
      %s23 = sadd.s32 %s16, 1
      %s24 = ssub.s32 %s16, %s23
      %p25 = scmp.eq.s32.totalorder %s24, 0
      %s27 = sadd.s32 %s26, 1
      %s28 = scalar_select %p25, %s26, %s27
      %p31 = pneg %p25
      %p32 = scmp.eq.s32.totalorder %s16, 1
      %p33 = por %p31, %p32
      %p34 = scmp.ne.s32.totalorder %s26, %s29
      %p35 = scmp.eq.s32.totalorder %s16, 0
      %p36 = por %p34, %p35
      %p37 = scmp.ne.s32.totalorder %s26, %s29
      %p38 = scmp.eq.s32.totalorder %s21, 1
      %p39 = por %p37, %p38
      %p40 = scmp.ne.s32.totalorder %s29, %s30
      %p41 = scmp.eq.s32.totalorder %s21, 0
      %p42 = por %p40, %p41
      %p43 = scmp.ne.s32.totalorder %s29, %s30
      %p44 = scmp.eq.s32.totalorder %s22, 1
      %p45 = por %p43, %p44
      %p47 = scmp.ne.s32.totalorder %s30, %s46
      %p48 = scmp.eq.s32.totalorder %s22, 0
      %p49 = por %p47, %p48
      %s51 = sadd.s32 %s50, 1
      %p54 = scmp.eq.s32.totalorder %s16, 1
      %p55 = scmp.ne.s32.totalorder %s50, %s52
      %p56 = scmp.eq.s32.totalorder %s16, 0
      %p57 = por %p55, %p56
      %p58 = scmp.ne.s32.totalorder %s50, %s52
      %p59 = scmp.eq.s32.totalorder %s21, 1
      %p60 = por %p58, %p59
      %p61 = scmp.ne.s32.totalorder %s52, %s53
      %p62 = scmp.eq.s32.totalorder %s21, 0
      %p63 = por %p61, %p62
      %p64 = scmp.ne.s32.totalorder %s52, %s53
      %p65 = scmp.eq.s32.totalorder %s22, 1
      %p66 = por %p64, %p65
      %p68 = scmp.ne.s32.totalorder %s53, %s67
      %p69 = scmp.eq.s32.totalorder %s22, 0
      %p70 = por %p68, %p69
      %s72 = sadd.s32 %s71, 1
      %p75 = scmp.eq.s32.totalorder %s16, 1
      %p76 = scmp.ne.s32.totalorder %s71, %s73
      %p77 = scmp.eq.s32.totalorder %s16, 0
      %p78 = por %p76, %p77
      %p79 = scmp.ne.s32.totalorder %s71, %s73
      %p80 = scmp.eq.s32.totalorder %s21, 1
      %p81 = por %p79, %p80
      %p82 = scmp.ne.s32.totalorder %s73, %s74
      %p83 = scmp.eq.s32.totalorder %s21, 0
      %p84 = por %p82, %p83
      %p85 = scmp.ne.s32.totalorder %s73, %s74
      %p86 = scmp.eq.s32.totalorder %s22, 1
      %p87 = por %p85, %p86
      %p89 = scmp.ne.s32.totalorder %s74, %s88
      %p90 = scmp.eq.s32.totalorder %s22, 0
      %p91 = por %p89, %p90
      %s92 = ssub.s32 %s16, %s23
      %p93 = scmp.eq.s32.totalorder %s92, 0
      %s95 = sadd.s32 %s94, 1
      %s96 = scalar_select %p93, %s94, %s95
      %p99 = pneg %p93
      %p100 = scmp.eq.s32.totalorder %s16, 1
      %p101 = por %p99, %p100
      %p102 = scmp.ne.s32.totalorder %s94, %s97
      %p103 = scmp.eq.s32.totalorder %s16, 0
      %p104 = por %p102, %p103
      %p105 = scmp.ne.s32.totalorder %s94, %s97
      %p106 = scmp.eq.s32.totalorder %s21, 1
      %p107 = por %p105, %p106
      %p108 = scmp.ne.s32.totalorder %s97, %s98
      %p109 = scmp.eq.s32.totalorder %s21, 0
      %p110 = por %p108, %p109
      %p111 = scmp.ne.s32.totalorder %s97, %s98
      %p112 = scmp.eq.s32.totalorder %s22, 1
      %p113 = por %p111, %p112
      %p115 = scmp.ne.s32.totalorder %s98, %s114
      %p116 = scmp.eq.s32.totalorder %s22, 0
      %p117 = por %p115, %p116
      %p118 = scmp.le.s32.totalorder 1, %s16
      %p119 = scmp.lt.s32.totalorder %s16, 3
      %p120 = pnand %p118, %p119
      %p121 = pneg %p120
      // Predicated region
      $region9: #{tpu_custom_call.1} parent=5 // pred_check
        _
      $region10: #{tpu_custom_call.1} parent=5 // pred_check_branch
        %123 = sbr.rel (%p120) target = $region12
      $region11: #{tpu_custom_call.1} parent=5 // pred_region
        %s124 = ssub.s32 %s16, 1
        // Predicated region
        $region13: #{tpu_custom_call.1} parent=11 // pred_check
          %p125 = pneg %p63
        $region14: #{tpu_custom_call.1} parent=11 // pred_check_branch
          %127 = sbr.rel (%p125) target = $region16
        $region15: #{tpu_custom_call.1} parent=11 // pred_region
          %s129 = ssub.s32 2048, 2048
          %130 = vsyncadd [#allocation6], %s129
          %s131 = sshll.u32 [#allocation5], 4
          %s132 = int_to_ptr.vmem [resolvable:$true] %s131
          %137 = dma.hbm_to_vmem [thread:$0]  %s1, 2048, %s132, [#allocation6], 64, 64, 4
        $region16: #{tpu_custom_call.1} parent=11 // pred_fallthru
          _
        // Predicated region
        $region17: #{tpu_custom_call.1} parent=11 // pred_check
          %p138 = pneg %p84
        $region18: #{tpu_custom_call.1} parent=11 // pred_check_branch
          %140 = sbr.rel (%p138) target = $region20
        $region19: #{tpu_custom_call.1} parent=11 // pred_region
          _
        $region20: #{tpu_custom_call.1} parent=11 // pred_fallthru
          _
      $region12: #{tpu_custom_call.1} parent=5 // pred_fallthru
        _
      %p141 = scmp.lt.s32.totalorder %s16, 2
      // Predicated region
      $region21: #{tpu_custom_call.1} parent=5 // pred_check
        %p142 = pneg %p141
      $region22: #{tpu_custom_call.1} parent=5 // pred_check_branch
        %144 = sbr.rel (%p142) target = $region24
      $region23: #{tpu_custom_call.1} parent=5 // pred_region
        // Predicated region
        $region25: #{tpu_custom_call.1} parent=23 // pred_check
          %p145 = pneg %p36
        $region26: #{tpu_custom_call.1} parent=23 // pred_check_branch
          %147 = sbr.rel (%p145) target = $region28
        $region27: #{tpu_custom_call.1} parent=23 // pred_region
          %s148 = sand.u32 %s26, 1
          %s149 = scalar_lea.sflag [#allocation3], %s148
          %s150 = sand.u32 %s26, 1
          %s151 = smul.addr %s150, 64
          %s152 = scalar_lea.vmem [#allocation2], %s151
          %s153 = smul.u32 8, %s16
          %s155 = ssub.s32 1024, 1024
          %156 = vsyncadd %s149, %s155
          %s157 = smul.addr %s153, 2
          %s158 = smul.addr %s157, 64
          %s159 = scalar_lea.hbm %s0, %s158
          %s160 = sshll.u32 %s152, 4
          %s161 = int_to_ptr.vmem [resolvable:$true] %s160
          %166 = dma.hbm_to_vmem [thread:$0]  %s159, 1024, %s161, %s149, 128, 128, 8
        $region28: #{tpu_custom_call.1} parent=23 // pred_fallthru
          _
      $region24: #{tpu_custom_call.1} parent=5 // pred_fallthru
        _
      %p167 = scmp.le.s32.totalorder 1, %s16
      %p168 = scmp.lt.s32.totalorder %s16, 3
      %p169 = pnand %p167, %p168
      %p170 = pneg %p169
      // Predicated region
      $region29: #{tpu_custom_call.1} parent=5 // pred_check
        _
      $region30: #{tpu_custom_call.1} parent=5 // pred_check_branch
        %172 = sbr.rel (%p169) target = $region32
      $region31: #{tpu_custom_call.1} parent=5 // pred_region
        %s173 = ssub.s32 %s16, 1
        %s174 = sand.u32 %s29, 1
        %s175 = scalar_lea.sflag [#allocation3], %s174
        %s176 = sand.u32 %s29, 1
        %s177 = smul.addr %s176, 64
        %s178 = scalar_lea.vmem [#allocation2], %s177
        // Predicated region
        $region33: #{tpu_custom_call.1} parent=31 // pred_check
          %p179 = pneg %p42
        $region34: #{tpu_custom_call.1} parent=31 // pred_check_branch
          %181 = sbr.rel (%p179) target = $region36
        $region35: #{tpu_custom_call.1} parent=31 // pred_region
          %182 = dma.done %s175, 1024
        $region36: #{tpu_custom_call.1} parent=31 // pred_fallthru
          _
        // Predicated region
        $region37: #{tpu_custom_call.1} parent=31 // pred_check
          %p183 = pneg %p63
        $region38: #{tpu_custom_call.1} parent=31 // pred_check_branch
          %185 = sbr.rel (%p183) target = $region40
        $region39: #{tpu_custom_call.1} parent=31 // pred_region
          %186 = dma.done [#allocation6], 2048
        $region40: #{tpu_custom_call.1} parent=31 // pred_fallthru
          _
        %s187 = sand.u32 %s29, 1
        %s188 = scalar_lea.sflag [#allocation3], %s187
        %s189 = sand.u32 %s29, 1
        %s190 = smul.addr %s189, 64
        %s191 = scalar_lea.vmem [#allocation2], %s190
        %p192 = pneg %p42
        %p193 = pneg %p39
        %p194 = pneg %p63
        %p195 = pneg %p60
        %p196 = pneg %p84
        %p197 = pneg %p81
        %p198 = pneg %p110
        %p199 = pneg %p107
        %s200 = sand.u32 %s97, 1
        %s201 = scalar_lea.sflag [#allocation4], %s200
        %s202 = sand.u32 %s97, 1
        %s203 = smul.addr %s202, 32
        %s204 = scalar_lea.vmem [#allocation7], %s203
        %s205 = smul.u32 8, %s21
        %s206 = smul.u32 8, %s21
        %v208 = vld [vmem:[%s178] sm:$0xff]
        %v209 = vld [vmem:[%s178 + $0x8] sm:$0xff]
        %v210 = vld [vmem:[%s178 + $0x10] sm:$0xff]
        %v211 = vld [vmem:[%s178 + $0x18] sm:$0xff]
        %v212 = vld [vmem:[%s178 + $0x20] sm:$0xff]
        %v213 = vld [vmem:[%s178 + $0x28] sm:$0xff]
        %v214 = vld [vmem:[%s178 + $0x30] sm:$0xff]
        %v215 = vld [vmem:[%s178 + $0x38] sm:$0xff]
        %v216 = vld [vmem:[#allocation5] sm:$0xf]
        %v217 = vld [vmem:[#allocation5 + $0x4] sm:$0xf]
        %v218 = vld [vmem:[#allocation5 + $0x8] sm:$0xf]
        %v219 = vld [vmem:[#allocation5 + $0xc] sm:$0xf]
        %v220 = vld [vmem:[#allocation5 + $0x10] sm:$0xf]
        %v221 = vld [vmem:[#allocation5 + $0x14] sm:$0xf]
        %v222 = vld [vmem:[#allocation5 + $0x18] sm:$0xf]
        %v223 = vld [vmem:[#allocation5 + $0x1c] sm:$0xf]
        %v224 = vld [vmem:[#allocation5 + $0x20] sm:$0xf]
        %v225 = vld [vmem:[#allocation5 + $0x24] sm:$0xf]
        %v226 = vld [vmem:[#allocation5 + $0x28] sm:$0xf]
        %v227 = vld [vmem:[#allocation5 + $0x2c] sm:$0xf]
        %v228 = vld [vmem:[#allocation5 + $0x30] sm:$0xf]
        %v229 = vld [vmem:[#allocation5 + $0x34] sm:$0xf]
        %v230 = vld [vmem:[#allocation5 + $0x38] sm:$0xf]
        %v231 = vld [vmem:[#allocation5 + $0x3c] sm:$0xf]
        %v232 = vld [vmem:[#allocation5 + $0x40] sm:$0xf]
        %v233 = vld [vmem:[#allocation5 + $0x44] sm:$0xf]
        %v234 = vld [vmem:[#allocation5 + $0x48] sm:$0xf]
        %v235 = vld [vmem:[#allocation5 + $0x4c] sm:$0xf]
        %v236 = vld [vmem:[#allocation5 + $0x50] sm:$0xf]
        %v237 = vld [vmem:[#allocation5 + $0x54] sm:$0xf]
        %v238 = vld [vmem:[#allocation5 + $0x58] sm:$0xf]
        %v239 = vld [vmem:[#allocation5 + $0x5c] sm:$0xf]
        %v240 = vld [vmem:[#allocation5 + $0x60] sm:$0xf]
        %v241 = vld [vmem:[#allocation5 + $0x64] sm:$0xf]
        %v242 = vld [vmem:[#allocation5 + $0x68] sm:$0xf]
        %v243 = vld [vmem:[#allocation5 + $0x6c] sm:$0xf]
        %v244 = vld [vmem:[#allocation5 + $0x70] sm:$0xf]
        %v245 = vld [vmem:[#allocation5 + $0x74] sm:$0xf]
        %v246 = vld [vmem:[#allocation5 + $0x78] sm:$0xf]
        %v247 = vld [vmem:[#allocation5 + $0x7c] sm:$0xf]
        %v248 = vld [vmem:[%s2] sm:$0x1]
        %v250 = vlaneseq
        %v251 = vshrl.u32 %v250, 7
        %v252 = vsub.s32 0, %v251
        %v253 = vrot.slane %v248, %v252
        %v263 = vunpack.c.l.b16 %v208
        %v264 = vunpack.c.h.b16 %v208
        %v265 = vunpack.c.l.b16 %v209
        %v266 = vunpack.c.h.b16 %v209
        %v267 = vunpack.c.l.b16 %v210
        %v268 = vunpack.c.h.b16 %v210
        %v269 = vunpack.c.l.b16 %v211
        %v270 = vunpack.c.h.b16 %v211
        %v271 = vunpack.c.l.b16 %v212
        %v272 = vunpack.c.h.b16 %v212
        %v273 = vunpack.c.l.b16 %v213
        %v274 = vunpack.c.h.b16 %v213
        %v275 = vunpack.c.l.b16 %v214
        %v276 = vunpack.c.h.b16 %v214
        %v277 = vunpack.c.l.b16 %v215
        %v278 = vunpack.c.h.b16 %v215
        %v279 = vpack.c.b16 %v265, %v263
        %v280 = vpack.c.b16 %v266, %v264
        %v281 = vpack.c.b16 %v269, %v267
        %v282 = vpack.c.b16 %v270, %v268
        %v283 = vpack.c.b16 %v273, %v271
        %v284 = vpack.c.b16 %v274, %v272
        %v285 = vpack.c.b16 %v277, %v275
        %v286 = vpack.c.b16 %v278, %v276
        %v327 = vunpack.c.l.b16 %v216
        %v328 = vunpack.c.l.b16 %v217
        %v329 = vunpack.c.l.b16 %v218
        %v330 = vunpack.c.l.b16 %v219
        %v331 = vunpack.c.l.b16 %v220
        %v332 = vunpack.c.l.b16 %v221
        %v333 = vunpack.c.l.b16 %v222
        %v334 = vunpack.c.l.b16 %v223
        %v335 = vunpack.c.l.b16 %v224
        %v336 = vunpack.c.l.b16 %v225
        %v337 = vunpack.c.l.b16 %v226
        %v338 = vunpack.c.l.b16 %v227
        %v339 = vunpack.c.l.b16 %v228
        %v340 = vunpack.c.l.b16 %v229
        %v341 = vunpack.c.l.b16 %v230
        %v342 = vunpack.c.l.b16 %v231
        %v343 = vunpack.c.l.b16 %v232
        %v344 = vunpack.c.l.b16 %v233
        %v345 = vunpack.c.l.b16 %v234
        %v346 = vunpack.c.l.b16 %v235
        %v347 = vunpack.c.l.b16 %v236
        %v348 = vunpack.c.l.b16 %v237
        %v349 = vunpack.c.l.b16 %v238
        %v350 = vunpack.c.l.b16 %v239
        %v351 = vunpack.c.l.b16 %v240
        %v352 = vunpack.c.l.b16 %v241
        %v353 = vunpack.c.l.b16 %v242
        %v354 = vunpack.c.l.b16 %v243
        %v355 = vunpack.c.l.b16 %v244
        %v356 = vunpack.c.l.b16 %v245
        %v357 = vunpack.c.l.b16 %v246
        %v358 = vunpack.c.l.b16 %v247
        %v359 = vpack.c.b16 %v328, %v327
        %v360 = vpack.c.b16 %v330, %v329
        %v361 = vpack.c.b16 %v332, %v331
        %v362 = vpack.c.b16 %v334, %v333
        %v363 = vpack.c.b16 %v336, %v335
        %v364 = vpack.c.b16 %v338, %v337
        %v365 = vpack.c.b16 %v340, %v339
        %v366 = vpack.c.b16 %v342, %v341
        %v367 = vpack.c.b16 %v344, %v343
        %v368 = vpack.c.b16 %v346, %v345
        %v369 = vpack.c.b16 %v348, %v347
        %v370 = vpack.c.b16 %v350, %v349
        %v371 = vpack.c.b16 %v352, %v351
        %v372 = vpack.c.b16 %v354, %v353
        %v373 = vpack.c.b16 %v356, %v355
        %v374 = vpack.c.b16 %v358, %v357
        %391 = vmatprep.subr.bf16.mxu0 0
        %392 = vmatpush1.bf16.msra.mxu0 %v359
        %393 = vmatprep.subr.bf16.mxu0 0
        %394 = vmatpush1.bf16.msra.mxu0 %v360
        %395 = vmatprep.subr.bf16.mxu0 0
        %396 = vmatpush1.bf16.msra.mxu0 %v361
        %397 = vmatprep.subr.bf16.mxu0 0
        %398 = vmatpush1.bf16.msra.mxu0 %v362
        %399 = vmatprep.subr.bf16.mxu0 0
        %400 = vmatpush1.bf16.msra.mxu0 %v363
        %401 = vmatprep.subr.bf16.mxu0 0
        %402 = vmatpush1.bf16.msra.mxu0 %v364
        %403 = vmatprep.subr.bf16.mxu0 0
        %404 = vmatpush1.bf16.msra.mxu0 %v365
        %405 = vmatprep.subr.bf16.mxu0 0
        %406 = vmatpush1.bf16.msra.mxu0 %v366
        %407 = vmatprep.subr.bf16.mxu0 0
        %408 = vmatpush1.bf16.msra.mxu0 %v367
        %409 = vmatprep.subr.bf16.mxu0 0
        %410 = vmatpush1.bf16.msra.mxu0 %v368
        %411 = vmatprep.subr.bf16.mxu0 0
        %412 = vmatpush1.bf16.msra.mxu0 %v369
        %413 = vmatprep.subr.bf16.mxu0 0
        %414 = vmatpush1.bf16.msra.mxu0 %v370
        %415 = vmatprep.subr.bf16.mxu0 0
        %416 = vmatpush1.bf16.msra.mxu0 %v371
        %417 = vmatprep.subr.bf16.mxu0 0
        %418 = vmatpush1.bf16.msra.mxu0 %v372
        %419 = vmatprep.subr.bf16.mxu0 0
        %420 = vmatpush1.bf16.msra.mxu0 %v373
        %421 = vmatprep.subr.bf16.mxu0 0
        %422 = vmatpush1.bf16.msra.mxu0 %v374
        %423 = vmatprep.mubr.bf16.mxu0 %v280
        %424 = vmatmul.mubr.bf16.gmra.mrb[0].mxu0 %v279
        %v425 = vpop.f32.mrb[0].mxu0
        %v426 = vadd.f32 %v253, %v425
        %v427 = vpop.f32.mrb[0].mxu0
        %v428 = vpop.f32.mrb[0].mxu0
        %v429 = vadd.f32 %v253, %v428
        %v430 = vpop.f32.mrb[0].mxu0
        %431 = vmatprep.mubr.bf16.mxu0 %v282
        %432 = vmatmul.mubr.bf16.gmra.mrb[0].mxu0 %v281
        %v433 = vpop.f32.mrb[0].mxu0
        %v434 = vadd.f32 %v253, %v433
        %v435 = vpop.f32.mrb[0].mxu0
        %v436 = vpop.f32.mrb[0].mxu0
        %v437 = vadd.f32 %v253, %v436
        %v438 = vpop.f32.mrb[0].mxu0
        %439 = vmatprep.mubr.bf16.mxu0 %v284
        %440 = vmatmul.mubr.bf16.gmra.mrb[0].mxu0 %v283
        %v441 = vpop.f32.mrb[0].mxu0
        %v442 = vadd.f32 %v253, %v441
        %v443 = vpop.f32.mrb[0].mxu0
        %v444 = vpop.f32.mrb[0].mxu0
        %v445 = vadd.f32 %v253, %v444
        %v446 = vpop.f32.mrb[0].mxu0
        %447 = vmatprep.mubr.bf16.mxu0 %v286
        %448 = vmatmul.mubr.bf16.gmra.mrb[0].mxu0 %v285
        %v449 = vpop.f32.mrb[0].mxu0
        %v450 = vadd.f32 %v253, %v449
        %v451 = vpop.f32.mrb[0].mxu0
        %v452 = vpop.f32.mrb[0].mxu0
        %v453 = vadd.f32 %v253, %v452
        %v454 = vpop.f32.mrb[0].mxu0
        %455 = vdwg.mxu0
        %v456 = vpack.c.bf16 %v429, %v426
        %v457 = vpack.c.bf16 %v437, %v434
        %v458 = vpack.c.bf16 %v445, %v442
        %v459 = vpack.c.bf16 %v453, %v450
        %v464 = vunpack.c.l.b16 %v456
        %v465 = vunpack.c.h.b16 %v456
        %v466 = vunpack.c.l.b16 %v457
        %v467 = vunpack.c.h.b16 %v457
        %v468 = vunpack.c.l.b16 %v458
        %v469 = vunpack.c.h.b16 %v458
        %v470 = vunpack.c.l.b16 %v459
        %v471 = vunpack.c.h.b16 %v459
        %v472 = vpack.c.b16 %v464, %v464
        %v473 = vpack.c.b16 %v465, %v465
        %v474 = vpack.c.b16 %v466, %v466
        %v475 = vpack.c.b16 %v467, %v467
        %v476 = vpack.c.b16 %v468, %v468
        %v477 = vpack.c.b16 %v469, %v469
        %v478 = vpack.c.b16 %v470, %v470
        %v479 = vpack.c.b16 %v471, %v471
        %488 = vst [vmem:[%s204] sm:$0xf] %v472
        %489 = vst [vmem:[%s204 + $0x4] sm:$0xf] %v473
        %490 = vst [vmem:[%s204 + $0x8] sm:$0xf] %v474
        %491 = vst [vmem:[%s204 + $0xc] sm:$0xf] %v475
        %492 = vst [vmem:[%s204 + $0x10] sm:$0xf] %v476
        %493 = vst [vmem:[%s204 + $0x14] sm:$0xf] %v477
        %494 = vst [vmem:[%s204 + $0x18] sm:$0xf] %v478
        %495 = vst [vmem:[%s204 + $0x1c] sm:$0xf] %v479
        %s496 = sand.u32 %s97, 1
        %s497 = scalar_lea.sflag [#allocation4], %s496
        %s498 = sand.u32 %s97, 1
        %s499 = smul.addr %s498, 32
        %s500 = scalar_lea.vmem [#allocation7], %s499
        // Predicated region
        $region41: #{tpu_custom_call.1} parent=31 // pred_check
          %p501 = pneg %p107
        $region42: #{tpu_custom_call.1} parent=31 // pred_check_branch
          %503 = sbr.rel (%p501) target = $region44
        $region43: #{tpu_custom_call.1} parent=31 // pred_region
          %s504 = smul.u32 8, %s21
          %s506 = ssub.s32 512, 512
          %507 = vsyncadd %s497, %s506
          %s508 = smul.addr %s504, 64
          %s509 = scalar_lea.hbm %s3, %s508
          %s510 = sshll.u32 %s500, 4
          %s511 = int_to_ptr.vmem [resolvable:$true] %s510
          %516 = dma.vmem_to_hbm [thread:$0]  %s511, 512, %s509, %s497, 64, 64, 4
        $region44: #{tpu_custom_call.1} parent=31 // pred_fallthru
          _
      $region32: #{tpu_custom_call.1} parent=5 // pred_fallthru
        _
      %p517 = scmp.le.s32.totalorder 2, %s16
      // Predicated region
      $region45: #{tpu_custom_call.1} parent=5 // pred_check
        %p518 = pneg %p517
      $region46: #{tpu_custom_call.1} parent=5 // pred_check_branch
        %520 = sbr.rel (%p518) target = $region48
      $region47: #{tpu_custom_call.1} parent=5 // pred_region
        %s521 = ssub.s32 %s16, 2
        // Predicated region
        $region49: #{tpu_custom_call.1} parent=47 // pred_check
          %p522 = pneg %p113
        $region50: #{tpu_custom_call.1} parent=47 // pred_check_branch
          %524 = sbr.rel (%p522) target = $region52
        $region51: #{tpu_custom_call.1} parent=47 // pred_region
          %s525 = sand.u32 %s98, 1
          %s526 = scalar_lea.sflag [#allocation4], %s525
          %s527 = sand.u32 %s98, 1
          %s528 = smul.addr %s527, 32
          %s529 = scalar_lea.vmem [#allocation7], %s528
          %530 = dma.done %s526, 512
        $region52: #{tpu_custom_call.1} parent=47 // pred_fallthru
          _
      $region48: #{tpu_custom_call.1} parent=5 // pred_fallthru
        _
    $region6: #{tpu_custom_call.1} parent=1 // loop_footer
      %s20 = sadd.s32 1, %s16
    $region7: #{tpu_custom_call.1} parent=1 // loop_footer_branch
      %15 = sbr.rel target = $region3
    $region8: #{tpu_custom_call.1} parent=1 // loop_exit
      _
    %531 = vsyncpa [#allocation3], 1
    %s532 = scalar_lea.sflag [#allocation3], 1
    %533 = vsyncpa %s532, 1
    %534 = vsyncpa [#allocation6], 1
    %535 = vsyncpa [#allocation4], 1
    %s536 = scalar_lea.sflag [#allocation4], 1
    %537 = vsyncpa %s536, 1

</llo_original>
